<compile_context>
chip_gen: v7x
topology: tpu7x:2x2x1
jax: 0.10.0
libtpu: 0.0.40
codegen_flags: <defaults>
</compile_context>

<pallas_src>
import jax
import jax.numpy as jnp
from jax.experimental import pallas as pl
from jax.experimental.pallas import tpu as pltpu


def _binarize_kernel(thr_ref, x_ref, o_ref):
    # Elementwise hot path on the VPU: 1 where x > threshold, else 0.
    x = x_ref[...]
    if jnp.issubdtype(x.dtype, jnp.floating):
        # float inputs: compare in the input dtype (matches torch semantics)
        o_ref[...] = (x > thr_ref[0].astype(x.dtype)).astype(o_ref.dtype)
    else:
        # int inputs: torch promotes int-tensor vs float-scalar to a float
        # compare, so do it in f32 (threshold=0.5 must mean "x >= 1").
        o_ref[...] = (x.astype(jnp.float32) > thr_ref[0]).astype(o_ref.dtype)


def _pick_tile_bytes():
    """Per-generation tile size keeping 2xin + 2xout buffers under the
    scoped-VMEM default (v6e/v7x: 32 MiB -> 6 MiB tiles; v5e & older: 16 MiB
    -> 3 MiB tiles)."""
    try:
        kind = jax.devices()[0].device_kind.lower()
    except Exception:
        kind = ""
    if ("v6" in kind) or ("v7" in kind):
        return 6 << 20
    return 3 << 20


def binarize(x, threshold=0.5, *, target_tile_bytes=None):
    """Forward of torchtools Binarize: 1 where x > threshold else 0, same
    shape and dtype as the input.  Works for any input shape; internally
    reshapes the 128-aligned bulk to a (rows, 128) lane-dense slab (free view)
    and tiles rows in large, sublane-aligned blocks."""
    orig_shape = x.shape
    orig_dtype = x.dtype
    lanes = 128
    itemsize = jnp.dtype(orig_dtype).itemsize
    # native sublane packing: 8 for 4-byte, 16 for 2-byte, 32 for 1-byte dtypes
    sublane_pack = max(8, 32 // itemsize)
    if target_tile_bytes is None:
        target_tile_bytes = _pick_tile_bytes()

    is_float = jnp.issubdtype(orig_dtype, jnp.floating)

    def _tail_binarize(vals):
        # PyTorch-equivalent semantics for the tiny non-kernel remainder.
        if is_float:
            return (vals > jnp.asarray(threshold, orig_dtype)).astype(orig_dtype)
        return (vals.astype(jnp.float32) > jnp.float32(threshold)).astype(orig_dtype)

    flat = x.reshape(-1)          # contiguous -> free bitcast, no HBM pass
    n = flat.shape[0]
    rows = n // lanes
    tail = n - rows * lanes

    if rows == 0:
        # fewer than 128 elements: a kernel launch would be pure overhead
        return _tail_binarize(flat).reshape(orig_shape)

    bulk = flat[: rows * lanes] if tail else flat
    slab = bulk.reshape(rows, lanes)   # lane-dense view; free when tail == 0

    # ~target_tile_bytes per input tile, aligned to the sublane packing.
    rows_rounded = pl.cdiv(rows, sublane_pack) * sublane_pack
    block_rows = max(sublane_pack, target_tile_bytes // (lanes * itemsize))
    block_rows = (block_rows // sublane_pack) * sublane_pack
    # keep >=2 grid blocks on non-tiny slabs so v7x's two TensorCores can each
    # take a balanced share (neutral on single-core v5e/v6e).
    if rows * lanes * itemsize >= (1 << 20):
        half = pl.cdiv(pl.cdiv(rows, 2), sublane_pack) * sublane_pack
        block_rows = min(block_rows, half)
    block_rows = min(block_rows, rows_rounded)
    grid = (pl.cdiv(rows, block_rows),)   # ragged row tail -> partial last block

    thr = jnp.full((1,), threshold, dtype=jnp.float32)

    out_slab = pl.pallas_call(
        _binarize_kernel,
        out_shape=jax.ShapeDtypeStruct((rows, lanes), orig_dtype),
        grid=grid,
        in_specs=[
            pl.BlockSpec(memory_space=pltpu.MemorySpace.SMEM),      # threshold
            pl.BlockSpec((block_rows, lanes), lambda i: (i, 0)),    # x slab
        ],
        out_specs=pl.BlockSpec((block_rows, lanes), lambda i: (i, 0)),
        # "parallel" lets the runtime shard the 1-D grid across v7x's two TCs;
        # if a trace shows it running single-core, switch to pltpu.CORE_PARALLEL.
        compiler_params=pltpu.CompilerParams(
            dimension_semantics=("parallel",)
        ),
    )(thr, slab)

    if tail:
        tail_out = _tail_binarize(flat[rows * lanes:])
        return jnp.concatenate([out_slab.reshape(-1), tail_out]).reshape(orig_shape)
    return out_slab.reshape(orig_shape)


if __name__ == "__main__":
    key = jax.random.PRNGKey(0)
    k1, k2, k3, k4 = jax.random.split(key, 4)

    # NCHW input like a PyTorch conv feature map (128-divisible -> pure kernel path)
    x = jax.random.uniform(k1, (2, 4, 16, 16), dtype=jnp.float32)
    y = jax.block_until_ready(binarize(x, threshold=0.5))
    y_ref = (x > 0.5).astype(x.dtype)
    assert y.shape == x.shape and y.dtype == x.dtype
    assert bool(jnp.all(y == y_ref))

    # ragged row-count (rows not a multiple of the sublane packing; no padding,
    # Pallas masks the partial last block)
    x2 = jax.random.uniform(k2, (10, 128), dtype=jnp.float32)
    y2 = jax.block_until_ready(binarize(x2, threshold=0.25))
    assert bool(jnp.all(y2 == (x2 > 0.25).astype(x2.dtype)))

    # non-128-divisible element count (bulk kernel + tiny tail op, no full pad)
    x3 = jax.random.uniform(k3, (3, 700), dtype=jnp.float32)
    y3 = jax.block_until_ready(binarize(x3, threshold=0.5))
    assert bool(jnp.all(y3 == (x3 > 0.5).astype(x3.dtype)))

    # integer input: compare must promote to float like PyTorch
    x4 = jax.random.randint(k4, (4, 100), -3, 3, dtype=jnp.int32)
    y4 = jax.block_until_ready(binarize(x4, threshold=0.5))
    assert bool(jnp.all(y4 == (x4.astype(jnp.float32) > 0.5).astype(jnp.int32)))

    # TODO(synk): custom autograd (straight-through backward) from binarize.apply
    # is not part of the forward pass and is not implemented here.

    print("KERNEL_OK")
</pallas_src>

<mosaic_0001>
module attributes {stable_mosaic.version = 11 : i64} {
  func.func @_binarize_kernel(%arg0: i32, %arg1: memref<1xf32, #tpu.memory_space<smem>>, %arg2: memref<16x128xf32, #tpu.memory_space<vmem>>, %arg3: memref<16x128xf32, #tpu.memory_space<vmem>>) attributes {dimension_semantics = [#tpu.dimension_semantics<parallel>], iteration_bounds = array<i64: 1>, scalar_prefetch = 0 : i64, scratch_operands = 0 : i64, tpu.core_type = #tpu.core_type<tc>, window_params = [{transform_indices = @transform_0, window_bounds = array<i64: 1>}, {transform_indices = @transform_1, window_bounds = array<i64: 16, 128>}, {transform_indices = @transform_2, window_bounds = array<i64: 16, 128>}]} {
    %c0 = arith.constant 0 : index
    %c0_0 = arith.constant 0 : index
    %0 = vector.load %arg2[%c0, %c0_0] : memref<16x128xf32, #tpu.memory_space<vmem>>, vector<16x128xf32>
    %c0_1 = arith.constant 0 : index
    %1 = memref.load %arg1[%c0_1] : memref<1xf32, #tpu.memory_space<smem>>
    %2 = vector.broadcast %1 : f32 to vector<16x128xf32>
    %3 = arith.cmpf ogt, %0, %2 : vector<16x128xf32>
    %4 = arith.extui %3 : vector<16x128xi1> to vector<16x128xi32>
    %5 = arith.sitofp %4 : vector<16x128xi32> to vector<16x128xf32>
    %c0_2 = arith.constant 0 : index
    %c0_3 = arith.constant 0 : index
    %6 = vector.load %arg3[%c0_2, %c0_3] : memref<16x128xf32, #tpu.memory_space<vmem>>, vector<16x128xf32>
    tpu.vector_store %arg3[%c0_2, %c0_3], %5 {strides = array<i32>} : memref<16x128xf32, #tpu.memory_space<vmem>>, vector<16x128xf32>,
    return
  }
  func.func @transform_0(%arg0: i32) -> i32 {
    %c0_i32 = arith.constant 0 : i32
    %c0_i32_0 = arith.constant 0 : i32
    return %c0_i32 : i32
  }
  func.func @transform_1(%arg0: i32) -> (i32, i32) {
    %c0_i32 = arith.constant 0 : i32
    %c0_i32_0 = arith.constant 0 : i32
    return %arg0, %c0_i32 : i32, i32
  }
  func.func @transform_2(%arg0: i32) -> (i32, i32) {
    %c0_i32 = arith.constant 0 : i32
    %c0_i32_0 = arith.constant 0 : i32
    return %arg0, %c0_i32 : i32, i32
  }
}

</mosaic_0001>

<llo_original>
// kernel: tpu_custom_call.1
$region0: #{tpu_custom_call.1}
  #allocation0 [shape = 'u32[]', space=smem, size = 0x4, offset = 0x4, fixed_abs, tag = 'smem constant byte address 0x4 - core index']
  #allocation1 [shape = 'u32[144,128]{1,0:T(1,128)}', space=vmem, size = 0x12000, scoped, tag = 'internal scratch']
  #allocation2 [shape = 'f32[1]{0:T(128)S(6)}', space=smem, size = 0x200, scoped, tag = 'scoped memory for tpu_custom_call.1']
  %s0 = inlined_call_operand.<no memory space> [shape: f32[1], index: 0, kind: input, shape index: {}]
  %s1 = inlined_call_operand.hbm [shape: f32[16,128], index: 1, kind: input, shape index: {}]
  %s2 = inlined_call_operand.hbm [shape: f32[16,128], index: 2, kind: output, shape index: {}]
  %s3 = sld [smem:[#allocation0]]
  $region22: #{tpu_custom_call.1} parent=0
    _
  %s5 = ssub.s32 1, %s3
  %s6 = scalar_select 0, %s5, %s3
  %7 = sst [smem:[#allocation2]] %s0
  $region1: #{tpu_custom_call.1} parent=0
    #allocation3 [shape = 'u8[8192]{0}', space=vmem, size = 0x2000, scoped, tag = 'input window, operand 1, single buffered']
    #allocation4 [shape = 's32[1]{0}', space=sflag, size = 0x4, scoped, tag = 'scoped memory for tpu_custom_call.1']
    #allocation5 [shape = 's32[1]{0}', space=sflag, size = 0x4, scoped, tag = 'scoped memory for tpu_custom_call.1']
    #allocation6 [shape = 'u8[8192]{0}', space=vmem, size = 0x2000, scoped, tag = 'output window, operand 0, single buffered']
    %8 = vsyncpa [#allocation4], 0
    %9 = vsyncpa [#allocation5], 0
    // Predicated region
    $region2: #{tpu_custom_call.1} parent=1 // pred_check
      _
    $region3: #{tpu_custom_call.1} parent=1 // pred_check_branch
      %11 = sbr.rel (0) target = $region5
    $region4: #{tpu_custom_call.1} parent=1 // pred_region
      _
    $region5: #{tpu_custom_call.1} parent=1 // pred_fallthru
      _
    // Predicated region
    $region6: #{tpu_custom_call.1} parent=1 // pred_check
      _
    $region7: #{tpu_custom_call.1} parent=1 // pred_check_branch
      %13 = sbr.rel (0) target = $region9
    $region8: #{tpu_custom_call.1} parent=1 // pred_region
      %s15 = ssub.s32 256, 256
      %16 = vsyncadd [#allocation4], %s15
      %s17 = sshll.u32 [#allocation3], 4
      %s18 = int_to_ptr.vmem [resolvable:$true] %s17
      %23 = dma.hbm_to_vmem [thread:$0]  %s1, 256, %s18, [#allocation4], 128, 128, 8
    $region9: #{tpu_custom_call.1} parent=1 // pred_fallthru
      _
    // Predicated region
    $region10: #{tpu_custom_call.1} parent=1 // pred_check
      _
    $region11: #{tpu_custom_call.1} parent=1 // pred_check_branch
      %25 = sbr.rel (0) target = $region13
    $region12: #{tpu_custom_call.1} parent=1 // pred_region
      %26 = dma.done [#allocation4], 256
    $region13: #{tpu_custom_call.1} parent=1 // pred_fallthru
      _
    %v27 = vld [vmem:[#allocation3] sm:$0xff]
    %v28 = vld [vmem:[#allocation3 + $0x8] sm:$0xff]
    %s29 = sld [smem:[#allocation2]]
    %v30 = vstv %s29
    %vm31 = vcmp.gt.f32.partialorder %v27, %v30
    %vm32 = vcmp.gt.f32.partialorder %v28, %v30
    %v33 = vsel %vm31, 1, 0
    %v34 = vsel %vm32, 1, 0
    %v35 = vcvt.s32.f32 %v33
    %v36 = vcvt.s32.f32 %v34
    %37 = vst [vmem:[#allocation6] sm:$0xff] %v35
    %38 = vst [vmem:[#allocation6 + $0x8] sm:$0xff] %v36
    // Predicated region
    $region14: #{tpu_custom_call.1} parent=1 // pred_check
      _
    $region15: #{tpu_custom_call.1} parent=1 // pred_check_branch
      %40 = sbr.rel (0) target = $region17
    $region16: #{tpu_custom_call.1} parent=1 // pred_region
      %s42 = ssub.s32 256, 256
      %43 = vsyncadd [#allocation5], %s42
      %s44 = sshll.u32 [#allocation6], 4
      %s45 = int_to_ptr.vmem [resolvable:$true] %s44
      %50 = dma.vmem_to_hbm [thread:$0]  %s45, 256, %s2, [#allocation5], 128, 128, 8
    $region17: #{tpu_custom_call.1} parent=1 // pred_fallthru
      _
    // Predicated region
    $region18: #{tpu_custom_call.1} parent=1 // pred_check
      _
    $region19: #{tpu_custom_call.1} parent=1 // pred_check_branch
      %52 = sbr.rel (0) target = $region21
    $region20: #{tpu_custom_call.1} parent=1 // pred_region
      %53 = dma.done [#allocation5], 256
    $region21: #{tpu_custom_call.1} parent=1 // pred_fallthru
      _
    %54 = vsyncpa [#allocation4], 1
    %55 = vsyncpa [#allocation5], 1

</llo_original>
